<compile_context>
chip_gen: v7x
topology: tpu7x:2x2x1
jax: 0.10.0
libtpu: 0.0.40
codegen_flags: <defaults>
</compile_context>

<pallas_src>
import jax
import jax.numpy as jnp
from jax.experimental import pallas as pl
from jax.experimental.pallas import tpu as pltpu


def _round_up(x, m):
    return ((x + m - 1) // m) * m


def _round_down(x, m):
    return (x // m) * m


def _make_reward_kernel(n_total, tk, ragged_k):
    def kernel(f_ref, w_ref, b_ref, o_ref, acc_ref):
        # f_ref: [TM, TK] VMEM; w_ref: [1, TK] VMEM; b_ref: [1, 1] SMEM;
        # o_ref: [TM, 1] VMEM; acc_ref: [TM, 1] f32 VMEM scratch.
        k = pl.program_id(1)

        @pl.when(k == 0)
        def _():
            acc_ref[...] = jnp.zeros_like(acc_ref)

        f = f_ref[...].astype(jnp.float32)
        w = w_ref[...].astype(jnp.float32)          # (1, TK) broadcasts over rows
        prod = f * w                                # VPU multiply
        if ragged_k:
            # Last K tile hangs past N: zero the invalid columns so OOB padding
            # (possibly NaN/Inf) never reaches the accumulator.
            col = jax.lax.broadcasted_iota(jnp.int32, prod.shape, 1)
            prod = jnp.where(col < (n_total - k * tk), prod, 0.0)
        acc_ref[...] += jnp.sum(prod, axis=-1, keepdims=True)   # XLU lane reduce

        @pl.when(k == pl.num_programs(1) - 1)
        def _():
            o_ref[...] = (acc_ref[...] + b_ref[0, 0]).astype(o_ref.dtype)

    return kernel


def dynamic_reward_model(F, weight, bias):
    """F: [B, N]; weight: [1, N] (torch nn.Linear layout); bias: [1].

    Matches torch: out = F @ weight.T + bias.  Returns [B, 1] float32.
    """
    B, N = F.shape
    itemsize = jnp.dtype(F.dtype).itemsize

    w = weight.reshape(1, N)                    # already lane-dense; no transpose
    b = bias.reshape(1, 1).astype(jnp.float32)  # scalar, lives in SMEM

    # ---- Tile selection -----------------------------------------------------
    # HBM-streaming kernel: big row tiles amortize the ~0.35us per-grid-step
    # overhead; K-tiling (not shrinking TM) bounds per-buffer VMEM for wide N.
    TM_MIN, TM_MAX = 512, 4096
    F_TILE_BUDGET = 8 << 20                     # bytes of F per tile (x2 buffered)

    if TM_MIN * N * itemsize <= F_TILE_BUDGET:
        tk = N                                  # whole feature dim (common case)
    else:
        tk = max(128, _round_down(F_TILE_BUDGET // (TM_MIN * itemsize), 128))
    ragged_k = (N % tk) != 0

    tm_target = _round_down(F_TILE_BUDGET // (tk * itemsize), 8)
    tm_target = max(TM_MIN, min(TM_MAX, tm_target))

    if B <= 16:
        # Single tile; tm == full batch dim keeps the BlockSpec legal for odd B.
        tm = B
    elif B <= tm_target:
        # Moderate batch: force >=2 row tiles so the "parallel" axis actually
        # gives both v7x TensorCores work (each TC streams its own tiles).
        tm = _round_up(pl.cdiv(B, 2), 8)
    else:
        tm = tm_target

    grid = (pl.cdiv(B, tm), pl.cdiv(N, tk))     # K (reduction) axis last

    # ---- Explicit VMEM budget (v5e default scoped VMEM is only 16 MiB). -----
    f_bytes = 2 * tm * tk * itemsize            # double-buffered F tiles
    out_bytes = 2 * tm * 128 * 4                # (tm, 1) blocks, lane-padded
    acc_bytes = tm * 128 * 4                    # accumulator scratch, lane-padded
    w_bytes = 2 * 8 * max(tk, 128) * 4          # weight blocks, sublane-padded
    vmem_limit = int(max(16 << 20,
                         min(32 << 20,
                             f_bytes + out_bytes + acc_bytes + w_bytes + (4 << 20))))

    cost = pl.CostEstimate(
        flops=2 * B * N,
        transcendentals=0,
        bytes_accessed=B * N * itemsize + N * jnp.dtype(w.dtype).itemsize + B * 4 + 4,
    )

    kernel = _make_reward_kernel(N, tk, ragged_k)

    return pl.pallas_call(
        kernel,
        out_shape=jax.ShapeDtypeStruct((B, 1), jnp.float32),
        grid_spec=pltpu.PrefetchScalarGridSpec(
            num_scalar_prefetch=0,
            grid=grid,
            in_specs=[
                pl.BlockSpec((tm, tk), lambda i, k: (i, k)),             # F tile
                pl.BlockSpec((1, tk), lambda i, k: (0, k)),              # weight
                pl.BlockSpec(memory_space=pltpu.MemorySpace.SMEM),       # bias
            ],
            out_specs=pl.BlockSpec((tm, 1), lambda i, k: (i, 0)),
            scratch_shapes=[pltpu.VMEM((tm, 1), jnp.float32)],
        ),
        compiler_params=pltpu.CompilerParams(
            dimension_semantics=("parallel", "arbitrary"),
            vmem_limit_bytes=vmem_limit,
        ),
        cost_estimate=cost,
    )(F, w, b)


if __name__ == "__main__":
    n = 256
    batch = 8

    key = jax.random.PRNGKey(0)
    k_f, k_w, k_b, k_f2 = jax.random.split(key, 4)

    # Deterministic synthetic parameters (shapes match nn.Linear(n, 1)).
    F = jax.random.normal(k_f, (batch, n), dtype=jnp.float32)
    weight = jax.random.normal(k_w, (1, n), dtype=jnp.float32) * 0.05  # [out=1, in=n]
    bias = jax.random.normal(k_b, (1,), dtype=jnp.float32) * 0.05      # [out=1]

    out = dynamic_reward_model(F, weight, bias)
    out = jax.block_until_ready(out)

    ref = F @ weight.T + bias
    assert out.shape == (batch, 1)
    assert jnp.allclose(out, ref, atol=1e-5, rtol=1e-5)

    # Secondary check: moderate batch (forces >=2 row tiles for the megacore
    # split) with a ragged last row tile.
    F2 = jax.random.normal(k_f2, (300, n), dtype=jnp.float32)
    out2 = jax.block_until_ready(dynamic_reward_model(F2, weight, bias))
    ref2 = F2 @ weight.T + bias
    assert out2.shape == (300, 1)
    assert jnp.allclose(out2, ref2, atol=1e-5, rtol=1e-5)

    # Secondary check: bf16 activations stream at half the HBM bytes; the
    # kernel upcasts to f32 in-register for accumulation.
    F2b = F2.astype(jnp.bfloat16)
    out3 = jax.block_until_ready(dynamic_reward_model(F2b, weight, bias))
    ref3 = F2b.astype(jnp.float32) @ weight.T + bias
    assert jnp.allclose(out3, ref3, atol=1e-4, rtol=1e-4)

    print("KERNEL_OK")
</pallas_src>

<mosaic_0001>
module attributes {stable_mosaic.version = 11 : i64} {
  func.func @kernel(%arg0: i32, %arg1: i32, %arg2: memref<8x256xf32, #tpu.memory_space<vmem>>, %arg3: memref<1x256xf32, #tpu.memory_space<vmem>>, %arg4: memref<1x1xf32, #tpu.memory_space<smem>>, %arg5: memref<8x1xf32, #tpu.memory_space<vmem>>, %arg6: memref<8x1xf32, #tpu.memory_space<vmem>>) attributes {dimension_semantics = [#tpu.dimension_semantics<parallel>, #tpu.dimension_semantics<arbitrary>], iteration_bounds = array<i64: 1, 1>, scalar_prefetch = 0 : i64, scratch_operands = 1 : i64, tpu.core_type = #tpu.core_type<tc>, window_params = [{transform_indices = @transform_0, window_bounds = array<i64: 8, 256>}, {transform_indices = @transform_1, window_bounds = array<i64: 1, 256>}, {transform_indices = @transform_2, window_bounds = array<i64: 1, 1>}, {transform_indices = @transform_3, window_bounds = array<i64: 8, 1>}]} {
    %c0_i32 = arith.constant 0 : i32
    %0 = arith.cmpi eq, %arg1, %c0_i32 : i32
    %1 = arith.extui %0 : i1 to i32
    %c0_i32_0 = arith.constant 0 : i32
    %2 = arith.cmpi ne, %1, %c0_i32_0 : i32
    scf.if %2 {
      %cst_10 = arith.constant 0.000000e+00 : f32
      %15 = vector.broadcast %cst_10 : f32 to vector<8x1xf32>
      %c0_11 = arith.constant 0 : index
      %c0_12 = arith.constant 0 : index
      %16 = vector.load %arg6[%c0_11, %c0_12] : memref<8x1xf32, #tpu.memory_space<vmem>>, vector<8x1xf32>
      tpu.vector_store %arg6[%c0_11, %c0_12], %15 {strides = array<i32>} : memref<8x1xf32, #tpu.memory_space<vmem>>, vector<8x1xf32>,
    } else {
    }
    %c0 = arith.constant 0 : index
    %c0_1 = arith.constant 0 : index
    %3 = vector.load %arg2[%c0, %c0_1] : memref<8x256xf32, #tpu.memory_space<vmem>>, vector<8x256xf32>
    %c0_2 = arith.constant 0 : index
    %c0_3 = arith.constant 0 : index
    %4 = vector.load %arg3[%c0_2, %c0_3] : memref<1x256xf32, #tpu.memory_space<vmem>>, vector<1x256xf32>
    %5 = vector.broadcast %4 : vector<1x256xf32> to vector<8x256xf32>
    %6 = arith.mulf %3, %5 : vector<8x256xf32>
    %c0_4 = arith.constant 0 : index
    %c0_5 = arith.constant 0 : index
    %7 = vector.load %arg6[%c0_4, %c0_5] : memref<8x1xf32, #tpu.memory_space<vmem>>, vector<8x1xf32>
    %cst = arith.constant dense<0.000000e+00> : vector<8xf32>
    %8 = vector.multi_reduction <add>, %6, %cst [1] : vector<8x256xf32> to vector<8xf32>
    %9 = vector.shape_cast %8 : vector<8xf32> to vector<8x1xf32>
    %10 = arith.addf %7, %9 : vector<8x1xf32>
    %c0_6 = arith.constant 0 : index
    %c0_7 = arith.constant 0 : index
    %11 = vector.load %arg6[%c0_6, %c0_7] : memref<8x1xf32, #tpu.memory_space<vmem>>, vector<8x1xf32>
    tpu.vector_store %arg6[%c0_6, %c0_7], %10 {strides = array<i32>} : memref<8x1xf32, #tpu.memory_space<vmem>>, vector<8x1xf32>,
    %c0_i32_8 = arith.constant 0 : i32
    %12 = arith.cmpi eq, %arg1, %c0_i32_8 : i32
    %13 = arith.extui %12 : i1 to i32
    %c0_i32_9 = arith.constant 0 : i32
    %14 = arith.cmpi ne, %13, %c0_i32_9 : i32
    scf.if %14 {
      %c0_10 = arith.constant 0 : index
      %c0_11 = arith.constant 0 : index
      %15 = vector.load %arg6[%c0_10, %c0_11] : memref<8x1xf32, #tpu.memory_space<vmem>>, vector<8x1xf32>
      %c0_12 = arith.constant 0 : index
      %c0_13 = arith.constant 0 : index
      %16 = memref.load %arg4[%c0_12, %c0_13] : memref<1x1xf32, #tpu.memory_space<smem>>
      %17 = vector.broadcast %16 : f32 to vector<8x1xf32>
      %18 = arith.addf %15, %17 : vector<8x1xf32>
      %c0_14 = arith.constant 0 : index
      %c0_15 = arith.constant 0 : index
      %19 = vector.load %arg5[%c0_14, %c0_15] : memref<8x1xf32, #tpu.memory_space<vmem>>, vector<8x1xf32>
      tpu.vector_store %arg5[%c0_14, %c0_15], %18 {strides = array<i32>} : memref<8x1xf32, #tpu.memory_space<vmem>>, vector<8x1xf32>,
    } else {
    }
    return
  }
  func.func @transform_0(%arg0: i32, %arg1: i32) -> (i32, i32) {
    %c0_i32 = arith.constant 0 : i32
    return %arg0, %arg1 : i32, i32
  }
  func.func @transform_1(%arg0: i32, %arg1: i32) -> (i32, i32) {
    %c0_i32 = arith.constant 0 : i32
    %c0_i32_0 = arith.constant 0 : i32
    return %c0_i32, %arg1 : i32, i32
  }
  func.func @transform_2(%arg0: i32, %arg1: i32) -> (i32, i32) {
    %c0_i32 = arith.constant 0 : i32
    %c0_i32_0 = arith.constant 0 : i32
    %c0_i32_1 = arith.constant 0 : i32
    return %c0_i32, %c0_i32_0 : i32, i32
  }
  func.func @transform_3(%arg0: i32, %arg1: i32) -> (i32, i32) {
    %c0_i32 = arith.constant 0 : i32
    %c0_i32_0 = arith.constant 0 : i32
    return %arg0, %c0_i32 : i32, i32
  }
}

</mosaic_0001>

<llo_original>
// kernel: tpu_custom_call.1
$region0: #{tpu_custom_call.1}
  #allocation0 [shape = 'u32[]', space=smem, size = 0x4, offset = 0x4, fixed_abs, tag = 'smem constant byte address 0x4 - core index']
  #allocation1 [shape = 'u32[144,128]{1,0:T(1,128)}', space=vmem, size = 0x12000, scoped, tag = 'internal scratch']
  #allocation2 [shape = 'f32[8,1]{1,0:T(8,128)}', space=vmem, size = 0x1000, scoped, tag = 'scratch operand']
  #allocation3 [shape = 'f32[1,1]{1,0:T(1,128)S(6)}', space=smem, size = 0x200, scoped, tag = 'scoped memory for tpu_custom_call.1']
  %s0 = inlined_call_operand.hbm [shape: f32[8,256], index: 0, kind: input, shape index: {}]
  %s1 = inlined_call_operand.vmem [shape: f32[1,256], index: 1, kind: input, shape index: {}]
  %s2 = inlined_call_operand.<no memory space> [shape: f32[1,1], index: 2, kind: input, shape index: {}]
  %s3 = inlined_call_operand.vmem [shape: f32[8,1], index: 3, kind: output, shape index: {}]
  %s4 = sld [smem:[#allocation0]]
  $region34: #{tpu_custom_call.1} parent=0
    _
  %s6 = ssub.s32 1, %s4
  %s7 = scalar_select 0, %s6, %s4
  %8 = sst [smem:[#allocation3]] %s2
  $region1: #{tpu_custom_call.1} parent=0
    #allocation4 [shape = 'u8[8192]{0}', space=vmem, size = 0x2000, scoped, tag = 'input window, operand 0, single buffered']
    #allocation5 [shape = 's32[1]{0}', space=sflag, size = 0x4, scoped, tag = 'scoped memory for tpu_custom_call.1']
    %9 = vsyncpa [#allocation5], 0
    // Predicated region
    $region2: #{tpu_custom_call.1} parent=1 // pred_check
      _
    $region3: #{tpu_custom_call.1} parent=1 // pred_check_branch
      %11 = sbr.rel (0) target = $region5
    $region4: #{tpu_custom_call.1} parent=1 // pred_region
      %s13 = ssub.s32 256, 256
      %14 = vsyncadd [#allocation5], %s13
      %s16 = sshll.u32 [#allocation4], 4
      %s17 = int_to_ptr.vmem [resolvable:$true] %s16
      %19 = dma.hbm_to_vmem [thread:$0]  %s0, 256, %s17, [#allocation5]
    $region5: #{tpu_custom_call.1} parent=1 // pred_fallthru
      _
    // Predicated region
    $region6: #{tpu_custom_call.1} parent=1 // pred_check
      _
    $region7: #{tpu_custom_call.1} parent=1 // pred_check_branch
      %21 = sbr.rel (0) target = $region9
    $region8: #{tpu_custom_call.1} parent=1 // pred_region
      _
    $region9: #{tpu_custom_call.1} parent=1 // pred_fallthru
      _
    // Predicated region
    $region10: #{tpu_custom_call.1} parent=1 // pred_check
      _
    $region11: #{tpu_custom_call.1} parent=1 // pred_check_branch
      %23 = sbr.rel (0) target = $region13
    $region12: #{tpu_custom_call.1} parent=1 // pred_region
      _
    $region13: #{tpu_custom_call.1} parent=1 // pred_fallthru
      _
    // Predicated region
    $region14: #{tpu_custom_call.1} parent=1 // pred_check
      _
    $region15: #{tpu_custom_call.1} parent=1 // pred_check_branch
      %25 = sbr.rel (0) target = $region17
    $region16: #{tpu_custom_call.1} parent=1 // pred_region
      %26 = dma.done [#allocation5], 256
    $region17: #{tpu_custom_call.1} parent=1 // pred_fallthru
      _
    %p27 = scmp.eq.s32.totalorder 0, 0
    // Predicated region
    $region18: #{tpu_custom_call.1} parent=1 // pred_check
      %p28 = pneg %p27
    $region19: #{tpu_custom_call.1} parent=1 // pred_check_branch
      %30 = sbr.rel (%p28) target = $region21
    $region20: #{tpu_custom_call.1} parent=1 // pred_region
      %vm31 = vcmask 7168
      %32 = vst.msk [vmem:[#allocation2] sm:$0xff] %vm31, 0.0
    $region21: #{tpu_custom_call.1} parent=1 // pred_fallthru
      _
    %v33 = vld [vmem:[#allocation4] sm:$0xff]
    %v34 = vld [vmem:[#allocation4 + $0x8] sm:$0xff]
    %v35 = vld [vmem:[%s1] sm:$0x3]
    %v37 = vlaneseq
    %v38 = vshrl.u32 %v37, 7
    %v39 = vsub.s32 0, %v38
    %v40 = vrot.slane %v35, %v39
    %v41 = vlaneseq
    %v42 = vshrl.u32 %v41, 7
    %v43 = vsub.s32 1, %v42
    %v44 = vrot.slane %v35, %v43
    %v47 = vmul.f32 %v33, %v40
    %v48 = vmul.f32 %v34, %v44
    %v49 = vld [vmem:[#allocation2] sm:$0xff]
    %v50 = vadd.f32 %v47, %v48
    %51 = vadd.xlane.f32.xlu0 %v50
    %v52 = vpop.xlane.xlu0 %51
    %v53 = vadd.f32 %v49, %v52
    %vm54 = vcmask 7168
    %55 = vst.msk [vmem:[#allocation2] sm:$0xff] %vm54, %v53
    // Predicated region
    $region22: #{tpu_custom_call.1} parent=1 // pred_check
      %p56 = pneg %p27
    $region23: #{tpu_custom_call.1} parent=1 // pred_check_branch
      %58 = sbr.rel (%p56) target = $region25
    $region24: #{tpu_custom_call.1} parent=1 // pred_region
      %v59 = vld [vmem:[#allocation2] sm:$0xff]
      %s60 = sld [smem:[#allocation3]]
      %v61 = vstv %s60
      %v62 = vadd.f32 %v59, %v61
      %63 = vst.msk [vmem:[%s3] sm:$0xff] %vm54, %v62
    $region25: #{tpu_custom_call.1} parent=1 // pred_fallthru
      _
    // Predicated region
    $region26: #{tpu_custom_call.1} parent=1 // pred_check
      _
    $region27: #{tpu_custom_call.1} parent=1 // pred_check_branch
      %65 = sbr.rel (0) target = $region29
    $region28: #{tpu_custom_call.1} parent=1 // pred_region
      _
    $region29: #{tpu_custom_call.1} parent=1 // pred_fallthru
      _
    // Predicated region
    $region30: #{tpu_custom_call.1} parent=1 // pred_check
      _
    $region31: #{tpu_custom_call.1} parent=1 // pred_check_branch
      %67 = sbr.rel (0) target = $region33
    $region32: #{tpu_custom_call.1} parent=1 // pred_region
      _
    $region33: #{tpu_custom_call.1} parent=1 // pred_fallthru
      _
    %68 = vsyncpa [#allocation5], 1

</llo_original>
